<compile_context>
chip_gen: v6e
topology: v6e:2x2x1
jax: 0.10.0
libtpu: 0.0.40
codegen_flags: <defaults>
</compile_context>

<pallas_src>
import functools

import jax
import jax.numpy as jnp
from jax.experimental import pallas as pl
from jax.experimental.pallas import tpu as pltpu


# ---------------------------------------------------------------------------
# Kernels
# ---------------------------------------------------------------------------

def _wl_kernel_fused(x_ref, w_ref, b_ref, o_ref, *, inv_tf, tf):
    """Collapsed-K kernel: one MXU dot per (batch-tile, output-tile).

    x_ref: (tm, D) f32  -- cast to bf16 here (cheap VPU pack, saves HBM pass)
    w_ref: (D, tn) bf16 -- block index depends only on the outer grid axis,
                           so it stays VMEM-resident across the batch sweep.
    b_ref: (1, tn) f32,  o_ref: (tm, tn) out dtype.
    """
    x_bf = x_ref[...].astype(jnp.bfloat16)
    acc = jnp.dot(x_bf, w_ref[...], preferred_element_type=jnp.float32)
    acc = acc + b_ref[...]
    o_ref[...] = (jnp.tanh(acc * inv_tf) * tf).astype(o_ref.dtype)


def _wl_kernel_ktiled(x_ref, w_ref, b_ref, o_ref, acc_ref, *, inv_tf, tf):
    """Fallback when the (D, tn) weight panel does not fit VMEM: K innermost
    ("arbitrary") with an f32 VMEM accumulator and a fused epilogue."""
    k = pl.program_id(2)

    @pl.when(k == 0)
    def _():
        acc_ref[...] = jnp.zeros_like(acc_ref)

    acc_ref[...] += jnp.dot(x_ref[...].astype(jnp.bfloat16), w_ref[...],
                            preferred_element_type=jnp.float32)

    @pl.when(k == pl.num_programs(2) - 1)
    def _():
        acc = acc_ref[...] + b_ref[...]
        o_ref[...] = (jnp.tanh(acc * inv_tf) * tf).astype(o_ref.dtype)


# ---------------------------------------------------------------------------
# Tiling helpers
# ---------------------------------------------------------------------------

def _vmem_capacity_bytes():
    """Physical VMEM of the attached TPU generation (per TensorCore)."""
    try:
        return int(pltpu.get_tpu_info().vmem_capacity_bytes)
    except Exception:
        return 64 << 20  # v7x per-TC VMEM: the smallest of v5e/v6e/v7x.


def _pick_tile(full, target, align):
    """Tile <= target, multiple of `align`; dims <= target use the full dim
    (always a legal block).  Ragged edges are handled by the cdiv grid."""
    if full <= target:
        return full
    return max(align, (target // align) * align)


def _largest_divisor_tile(full, target, align):
    """Largest tile <= target that exactly divides `full` and is a multiple
    of `align`; falls back to the full dimension."""
    if full <= target:
        return full
    t = (target // align) * align
    while t >= align:
        if full % t == 0:
            return t
        t -= align
    # TODO(synk): pad K instead of degenerating to one huge K block when D has
    # no 128-aligned divisor <= target.
    return full


# ---------------------------------------------------------------------------
# Forward
# ---------------------------------------------------------------------------

def weak_learner_forward(x, weight_do, bias, tanh_factor):
    """x: (B, C, H, W) or (B, D) float32.
    weight_do: (input_size, output_size), ideally already bf16 (persisted;
               this is nn.Linear's weight pre-transposed).
    bias: (output_size,) f32.
    tanh_factor: Python float (static, baked in at trace time).
    Returns (B, output_size) in x.dtype."""
    B = x.shape[0]
    x2d = x.reshape(B, -1)                       # matches torch .view
    D, O = weight_do.shape
    assert x2d.shape[1] == D

    if weight_do.dtype != jnp.bfloat16:
        # Off the preferred path: persist the weight as bf16 (see init_*) to
        # avoid this per-call cast.
        weight_do = weight_do.astype(jnp.bfloat16)
    b2d = bias.reshape(1, O).astype(jnp.float32)

    out_dtype = x.dtype
    out_bytes = jnp.dtype(out_dtype).itemsize
    inv_tf = 1.0 / float(tanh_factor)
    tf = float(tanh_factor)

    cap = _vmem_capacity_bytes()
    budget = int(cap * 0.6)                      # leave headroom for Mosaic

    # ---------------- preferred path: collapsed K ----------------
    tn = _pick_tile(O, 512, 128)
    tm = _pick_tile(B, 256, 16)

    def fused_vmem(tm_, tn_):
        return (2 * D * tn_ * 2        # bf16 weight panel, double-buffered
                + 2 * tm_ * D * 4      # f32 x tile, double-buffered
                + 2 * tm_ * tn_ * 4    # output tile
                + 2 * tn_ * 4)         # bias

    while fused_vmem(tm, tn) > budget and tn > 128:
        tn = max(128, (tn // 2 // 128) * 128)
    while fused_vmem(tm, tn) > budget and tm > 16:
        tm = max(16, (tm // 2 // 16) * 16)
    collapse_k = fused_vmem(tm, tn) <= budget

    if collapse_k:
        ni = pl.cdiv(B, tm)
        nj = pl.cdiv(O, tn)
        # v7x megacore: give the second TensorCore work when the grid is 1x1.
        if ni == 1 and nj == 1 and O > 128:
            tn_half = ((O // 2 + 127) // 128) * 128
            if 0 < tn_half < O:
                tn = tn_half
                nj = pl.cdiv(O, tn)

        vmem_needed = fused_vmem(tm, tn)
        cost = pl.CostEstimate(
            flops=2 * B * D * O,
            transcendentals=B * O,
            # weight streamed once; x re-streamed per output-tile column.
            bytes_accessed=int(nj * B * D * 4 + D * O * 2 + nj * O * 4
                               + B * O * out_bytes),
        )
        kernel = functools.partial(_wl_kernel_fused, inv_tf=inv_tf, tf=tf)
        grid_spec = pltpu.PrefetchScalarGridSpec(
            num_scalar_prefetch=0,
            grid=(nj, ni),   # j outer: weight panel resident across the i sweep
            in_specs=[
                pl.BlockSpec((tm, D), lambda j, i: (i, 0)),   # x (f32)
                pl.BlockSpec((D, tn), lambda j, i: (0, j)),   # weight (bf16)
                pl.BlockSpec((1, tn), lambda j, i: (0, j)),   # bias (f32)
            ],
            out_specs=pl.BlockSpec((tm, tn), lambda j, i: (i, j)),
        )
        dim_sem = ("parallel", "parallel")
    else:
        # ---------------- fallback: K-tiled with f32 accumulator ----------------
        tm = _pick_tile(B, 256, 16)
        tn = _pick_tile(O, 256, 128)
        tk = _largest_divisor_tile(D, 2048, 128)
        ni, nj, nk = pl.cdiv(B, tm), pl.cdiv(O, tn), D // tk
        vmem_needed = (2 * tm * tk * 4 + 2 * tk * tn * 2
                       + 2 * tm * tn * out_bytes + 2 * tn * 4 + tm * tn * 4)
        cost = pl.CostEstimate(
            flops=2 * B * D * O,
            transcendentals=B * O,
            bytes_accessed=int(nj * B * D * 4 + ni * D * O * 2
                               + ni * nj * O * 4 + B * O * out_bytes),
        )
        kernel = functools.partial(_wl_kernel_ktiled, inv_tf=inv_tf, tf=tf)
        grid_spec = pltpu.PrefetchScalarGridSpec(
            num_scalar_prefetch=0,
            grid=(ni, nj, nk),
            in_specs=[
                pl.BlockSpec((tm, tk), lambda i, j, k: (i, k)),
                pl.BlockSpec((tk, tn), lambda i, j, k: (k, j)),
                pl.BlockSpec((1, tn), lambda i, j, k: (0, j)),
            ],
            out_specs=pl.BlockSpec((tm, tn), lambda i, j, k: (i, j)),
            scratch_shapes=[pltpu.VMEM((tm, tn), jnp.float32)],
        )
        dim_sem = ("parallel", "parallel", "arbitrary")

    vmem_limit = int(min(int(cap * 0.9), max(32 << 20, 2 * vmem_needed)))

    return pl.pallas_call(
        kernel,
        out_shape=jax.ShapeDtypeStruct((B, O), out_dtype),
        grid_spec=grid_spec,
        cost_estimate=cost,
        compiler_params=pltpu.CompilerParams(
            dimension_semantics=dim_sem,
            vmem_limit_bytes=vmem_limit,
        ),
    )(x2d, weight_do, b2d)


# ---------------------------------------------------------------------------
# Params (weight persisted pre-transposed in bf16 -> zero per-call casts)
# ---------------------------------------------------------------------------

def init_weak_learner_params(key, input_size, output_size):
    """Weight returned in (input_size, output_size) layout (pre-transposed vs
    nn.Linear) and cast to bf16 ONCE here, off the hot path.
    Mimics keras VarianceScaling(scale=1.0, mode='fan_in',
    distribution='truncated_normal'); bias uses the PyTorch Linear default."""
    kw, kb = jax.random.split(key)
    stddev = (1.0 / input_size) ** 0.5 / 0.87962566103423978
    w_do = jax.random.truncated_normal(
        kw, -2.0, 2.0, (input_size, output_size), jnp.float32) * stddev
    bound = (1.0 / input_size) ** 0.5
    bias = jax.random.uniform(kb, (output_size,), jnp.float32, -bound, bound)
    return w_do.astype(jnp.bfloat16), bias


if __name__ == "__main__":
    key = jax.random.PRNGKey(0)
    k_x, k_p = jax.random.split(key)

    # Small shapes consistent with the module's forward (flatten -> linear).
    B, C, H, W = 2, 4, 16, 16
    input_size = C * H * W                        # 1024
    output_size = 128
    tanh_factor = 2.5

    x = jax.random.normal(k_x, (B, C, H, W), dtype=jnp.float32)
    w_do_bf16, bias = init_weak_learner_params(k_p, input_size, output_size)

    fwd = jax.jit(functools.partial(weak_learner_forward,
                                    tanh_factor=tanh_factor))
    out = jax.block_until_ready(fwd(x, w_do_bf16, bias))
    assert out.shape == (B, output_size)

    # Reference with the kernel's precision choice (bf16 operands, f32 acc).
    x2d = x.reshape(B, -1)
    xb = x2d.astype(jnp.bfloat16).astype(jnp.float32)
    wb = w_do_bf16.astype(jnp.float32)
    ref = jnp.tanh((xb @ wb + bias) / tanh_factor) * tanh_factor
    assert jnp.allclose(out, ref, atol=1e-4, rtol=1e-4), \
        float(jnp.max(jnp.abs(out - ref)))

    # Loose sanity check against f32-x semantics (bf16 x-cast is the only delta).
    ref_f32x = jnp.tanh((x2d @ wb + bias) / tanh_factor) * tanh_factor
    assert jnp.allclose(out, ref_f32x, atol=2e-2, rtol=2e-2), \
        float(jnp.max(jnp.abs(out - ref_f32x)))

    print("KERNEL_OK")
</pallas_src>

<mosaic_0001>
module attributes {stable_mosaic.version = 11 : i64} {
  func.func @_wl_kernel_fused(%arg0: i32, %arg1: i32, %arg2: memref<2x1024xf32, #tpu.memory_space<vmem>>, %arg3: memref<1024x128xbf16, #tpu.memory_space<vmem>>, %arg4: memref<1x128xf32, #tpu.memory_space<vmem>>, %arg5: memref<2x128xf32, #tpu.memory_space<vmem>>) attributes {dimension_semantics = [#tpu.dimension_semantics<parallel>, #tpu.dimension_semantics<parallel>], iteration_bounds = array<i64: 1, 1>, scalar_prefetch = 0 : i64, scratch_operands = 0 : i64, tpu.core_type = #tpu.core_type<tc>, window_params = [{transform_indices = @transform_0, window_bounds = array<i64: 2, 1024>}, {transform_indices = @transform_1, window_bounds = array<i64: 1024, 128>}, {transform_indices = @transform_2, window_bounds = array<i64: 1, 128>}, {transform_indices = @transform_3, window_bounds = array<i64: 2, 128>}]} {
    %c0 = arith.constant 0 : index
    %c0_0 = arith.constant 0 : index
    %0 = vector.load %arg2[%c0, %c0_0] : memref<2x1024xf32, #tpu.memory_space<vmem>>, vector<2x1024xf32>
    %1 = arith.truncf %0 : vector<2x1024xf32> to vector<2x1024xbf16>
    %c0_1 = arith.constant 0 : index
    %c0_2 = arith.constant 0 : index
    %2 = vector.load %arg3[%c0_1, %c0_2] : memref<1024x128xbf16, #tpu.memory_space<vmem>>, vector<1024x128xbf16>
    %cst = arith.constant dense<0.000000e+00> : vector<2x128xf32>
    %3 = tpu.matmul %1, %2, %cst {dimension_numbers = #tpu.dot_dimension_numbers<[1], [0], [0], [1], [0, 0, 1, 1], [], []>} : vector<2x1024xbf16>, vector<1024x128xbf16>, vector<2x128xf32> -> vector<2x128xf32>
    %c0_3 = arith.constant 0 : index
    %c0_4 = arith.constant 0 : index
    %4 = vector.load %arg4[%c0_3, %c0_4] : memref<1x128xf32, #tpu.memory_space<vmem>>, vector<1x128xf32>
    %5 = vector.broadcast %4 : vector<1x128xf32> to vector<2x128xf32>
    %6 = arith.addf %3, %5 : vector<2x128xf32>
    %cst_5 = arith.constant 4.000000e-01 : f32
    %7 = vector.broadcast %cst_5 : f32 to vector<2x128xf32>
    %8 = arith.mulf %6, %7 : vector<2x128xf32>
    %9 = math.tanh %8 : vector<2x128xf32>
    %cst_6 = arith.constant 2.500000e+00 : f32
    %10 = vector.broadcast %cst_6 : f32 to vector<2x128xf32>
    %11 = arith.mulf %9, %10 : vector<2x128xf32>
    %c0_7 = arith.constant 0 : index
    %c0_8 = arith.constant 0 : index
    %12 = vector.load %arg5[%c0_7, %c0_8] : memref<2x128xf32, #tpu.memory_space<vmem>>, vector<2x128xf32>
    tpu.vector_store %arg5[%c0_7, %c0_8], %11 {strides = array<i32>} : memref<2x128xf32, #tpu.memory_space<vmem>>, vector<2x128xf32>,
    return
  }
  func.func @transform_0(%arg0: i32, %arg1: i32) -> (i32, i32) {
    %c0_i32 = arith.constant 0 : i32
    %c0_i32_0 = arith.constant 0 : i32
    return %arg1, %c0_i32 : i32, i32
  }
  func.func @transform_1(%arg0: i32, %arg1: i32) -> (i32, i32) {
    %c0_i32 = arith.constant 0 : i32
    %c0_i32_0 = arith.constant 0 : i32
    return %c0_i32, %arg0 : i32, i32
  }
  func.func @transform_2(%arg0: i32, %arg1: i32) -> (i32, i32) {
    %c0_i32 = arith.constant 0 : i32
    %c0_i32_0 = arith.constant 0 : i32
    return %c0_i32, %arg0 : i32, i32
  }
  func.func @transform_3(%arg0: i32, %arg1: i32) -> (i32, i32) {
    %c0_i32 = arith.constant 0 : i32
    return %arg1, %arg0 : i32, i32
  }
}

</mosaic_0001>

<llo_original>
// kernel: weak_learner_forward.1
$region0: #{weak_learner_forward.1}
  #allocation0 [shape = 'u32[]', space=smem, size = 0x4, offset = 0x4, fixed_abs, tag = 'smem constant byte address 0x4 - core index']
  #allocation1 [shape = 'u32[144,128]{1,0:T(1,128)}', space=vmem, size = 0x12000, scoped, tag = 'internal scratch']
  %s0 = inlined_call_operand.vmem [shape: f32[2,1024], index: 0, kind: input, shape index: {}]
  %s1 = inlined_call_operand.hbm [shape: bf16[1024,128], index: 1, kind: input, shape index: {}]
  %s2 = inlined_call_operand.vmem [shape: f32[1,128], index: 2, kind: input, shape index: {}]
  %s3 = inlined_call_operand.hbm [shape: f32[2,128], index: 3, kind: output, shape index: {}]
  %s4 = sld [smem:[#allocation0]]
  $region26: #{weak_learner_forward.1} parent=0
    _
  %s6 = ssub.s32 1, %s4
  %s7 = scalar_select 0, %s6, %s4
  $region1: #{weak_learner_forward.1} parent=0
    #allocation2 [shape = 'u8[262144]{0}', space=vmem, size = 0x40000, scoped, tag = 'input window, operand 1, single buffered']
    #allocation3 [shape = 's32[1]{0}', space=sflag, size = 0x4, scoped, tag = 'scoped memory for weak_learner_forward.1']
    #allocation4 [shape = 's32[1]{0}', space=sflag, size = 0x4, scoped, tag = 'scoped memory for weak_learner_forward.1']
    #allocation5 [shape = 'u8[1024]{0}', space=vmem, size = 0x400, scoped, tag = 'output window, operand 0, single buffered']
    %8 = vsyncpa [#allocation3], 0
    %9 = vsyncpa [#allocation4], 0
    // Predicated region
    $region2: #{weak_learner_forward.1} parent=1 // pred_check
      _
    $region3: #{weak_learner_forward.1} parent=1 // pred_check_branch
      %11 = sbr.rel (0) target = $region5
    $region4: #{weak_learner_forward.1} parent=1 // pred_region
      _
    $region5: #{weak_learner_forward.1} parent=1 // pred_fallthru
      _
    // Predicated region
    $region6: #{weak_learner_forward.1} parent=1 // pred_check
      _
    $region7: #{weak_learner_forward.1} parent=1 // pred_check_branch
      %13 = sbr.rel (0) target = $region9
    $region8: #{weak_learner_forward.1} parent=1 // pred_region
      %s15 = ssub.s32 8192, 8192
      %16 = vsyncadd [#allocation3], %s15
      %s17 = sshll.u32 [#allocation2], 4
      %s18 = int_to_ptr.vmem [resolvable:$true] %s17
      %23 = dma.hbm_to_vmem [thread:$0]  %s1, 8192, %s18, [#allocation3], 64, 64, 4
    $region9: #{weak_learner_forward.1} parent=1 // pred_fallthru
      _
    // Predicated region
    $region10: #{weak_learner_forward.1} parent=1 // pred_check
      _
    $region11: #{weak_learner_forward.1} parent=1 // pred_check_branch
      %25 = sbr.rel (0) target = $region13
    $region12: #{weak_learner_forward.1} parent=1 // pred_region
      _
    $region13: #{weak_learner_forward.1} parent=1 // pred_fallthru
      _
    // Predicated region
    $region14: #{weak_learner_forward.1} parent=1 // pred_check
      _
    $region15: #{weak_learner_forward.1} parent=1 // pred_check_branch
      %27 = sbr.rel (0) target = $region17
    $region16: #{weak_learner_forward.1} parent=1 // pred_region
      %28 = dma.done [#allocation3], 8192
    $region17: #{weak_learner_forward.1} parent=1 // pred_fallthru
      _
    %v30 = vld [vmem:[%s0] sm:$0xff]
    %v31 = vld [vmem:[%s0 + $0x8] sm:$0xff]
    %v34 = vcombine.high %v30, %v30
    %v36 = vunpack.c.l.s4 1983009808
    %v37 = vunpack.c.0.s8 %v36
    %v38 = vlaneseq
    %v39 = vshrl.u32 %v38, 7
    %v40 = vsub.s32 %v37, %v39
    %v41 = vrot.slane %v30, %v40
    %v43 = vunpack.c.l.s4 1983009808
    %v44 = vunpack.c.0.s8 %v43
    %v45 = vlaneseq
    %v46 = vshrl.u32 %v45, 7
    %v47 = vsub.s32 %v44, %v46
    %v48 = vrot.slane %v34, %v47
    %v49 = vcombine.high %v41, %v41
    %v50 = vcombine.high %v48, %v48
    %v51 = vcombine.high %v31, %v31
    %v53 = vunpack.c.l.s4 1983009808
    %v54 = vunpack.c.0.s8 %v53
    %v55 = vlaneseq
    %v56 = vshrl.u32 %v55, 7
    %v57 = vsub.s32 %v54, %v56
    %v58 = vrot.slane %v31, %v57
    %v60 = vunpack.c.l.s4 1983009808
    %v61 = vunpack.c.0.s8 %v60
    %v62 = vlaneseq
    %v63 = vshrl.u32 %v62, 7
    %v64 = vsub.s32 %v61, %v63
    %v65 = vrot.slane %v51, %v64
    %v66 = vcombine.high %v58, %v58
    %v67 = vcombine.high %v65, %v65
    %v76 = vpack.c.bf16 %v41, %v41
    %v77 = vpack.c.bf16 %v49, %v49
    %v78 = vpack.c.bf16 %v48, %v48
    %v79 = vpack.c.bf16 %v50, %v50
    %v80 = vpack.c.bf16 %v58, %v58
    %v81 = vpack.c.bf16 %v66, %v66
    %v82 = vpack.c.bf16 %v65, %v65
    %v83 = vpack.c.bf16 %v67, %v67
    %v84 = vld [vmem:[#allocation2] sm:$0xf]
    %v85 = vld [vmem:[#allocation2 + $0x4] sm:$0xf]
    %v86 = vld [vmem:[#allocation2 + $0x8] sm:$0xf]
    %v87 = vld [vmem:[#allocation2 + $0xc] sm:$0xf]
    %v88 = vld [vmem:[#allocation2 + $0x10] sm:$0xf]
    %v89 = vld [vmem:[#allocation2 + $0x14] sm:$0xf]
    %v90 = vld [vmem:[#allocation2 + $0x18] sm:$0xf]
    %v91 = vld [vmem:[#allocation2 + $0x1c] sm:$0xf]
    %v92 = vld [vmem:[#allocation2 + $0x20] sm:$0xf]
    %v93 = vld [vmem:[#allocation2 + $0x24] sm:$0xf]
    %v94 = vld [vmem:[#allocation2 + $0x28] sm:$0xf]
    %v95 = vld [vmem:[#allocation2 + $0x2c] sm:$0xf]
    %v96 = vld [vmem:[#allocation2 + $0x30] sm:$0xf]
    %v97 = vld [vmem:[#allocation2 + $0x34] sm:$0xf]
    %v98 = vld [vmem:[#allocation2 + $0x38] sm:$0xf]
    %v99 = vld [vmem:[#allocation2 + $0x3c] sm:$0xf]
    %v100 = vld [vmem:[#allocation2 + $0x40] sm:$0xf]
    %v101 = vld [vmem:[#allocation2 + $0x44] sm:$0xf]
    %v102 = vld [vmem:[#allocation2 + $0x48] sm:$0xf]
    %v103 = vld [vmem:[#allocation2 + $0x4c] sm:$0xf]
    %v104 = vld [vmem:[#allocation2 + $0x50] sm:$0xf]
    %v105 = vld [vmem:[#allocation2 + $0x54] sm:$0xf]
    %v106 = vld [vmem:[#allocation2 + $0x58] sm:$0xf]
    %v107 = vld [vmem:[#allocation2 + $0x5c] sm:$0xf]
    %v108 = vld [vmem:[#allocation2 + $0x60] sm:$0xf]
    %v109 = vld [vmem:[#allocation2 + $0x64] sm:$0xf]
    %v110 = vld [vmem:[#allocation2 + $0x68] sm:$0xf]
    %v111 = vld [vmem:[#allocation2 + $0x6c] sm:$0xf]
    %v112 = vld [vmem:[#allocation2 + $0x70] sm:$0xf]
    %v113 = vld [vmem:[#allocation2 + $0x74] sm:$0xf]
    %v114 = vld [vmem:[#allocation2 + $0x78] sm:$0xf]
    %v115 = vld [vmem:[#allocation2 + $0x7c] sm:$0xf]
    %v116 = vld [vmem:[#allocation2 + $0x80] sm:$0xf]
    %v117 = vld [vmem:[#allocation2 + $0x84] sm:$0xf]
    %v118 = vld [vmem:[#allocation2 + $0x88] sm:$0xf]
    %v119 = vld [vmem:[#allocation2 + $0x8c] sm:$0xf]
    %v120 = vld [vmem:[#allocation2 + $0x90] sm:$0xf]
    %v121 = vld [vmem:[#allocation2 + $0x94] sm:$0xf]
    %v122 = vld [vmem:[#allocation2 + $0x98] sm:$0xf]
    %v123 = vld [vmem:[#allocation2 + $0x9c] sm:$0xf]
    %v124 = vld [vmem:[#allocation2 + $0xa0] sm:$0xf]
    %v125 = vld [vmem:[#allocation2 + $0xa4] sm:$0xf]
    %v126 = vld [vmem:[#allocation2 + $0xa8] sm:$0xf]
    %v127 = vld [vmem:[#allocation2 + $0xac] sm:$0xf]
    %v128 = vld [vmem:[#allocation2 + $0xb0] sm:$0xf]
    %v129 = vld [vmem:[#allocation2 + $0xb4] sm:$0xf]
    %v130 = vld [vmem:[#allocation2 + $0xb8] sm:$0xf]
    %v131 = vld [vmem:[#allocation2 + $0xbc] sm:$0xf]
    %v132 = vld [vmem:[#allocation2 + $0xc0] sm:$0xf]
    %v133 = vld [vmem:[#allocation2 + $0xc4] sm:$0xf]
    %v134 = vld [vmem:[#allocation2 + $0xc8] sm:$0xf]
    %v135 = vld [vmem:[#allocation2 + $0xcc] sm:$0xf]
    %v136 = vld [vmem:[#allocation2 + $0xd0] sm:$0xf]
    %v137 = vld [vmem:[#allocation2 + $0xd4] sm:$0xf]
    %v138 = vld [vmem:[#allocation2 + $0xd8] sm:$0xf]
    %v139 = vld [vmem:[#allocation2 + $0xdc] sm:$0xf]
    %v140 = vld [vmem:[#allocation2 + $0xe0] sm:$0xf]
    %v141 = vld [vmem:[#allocation2 + $0xe4] sm:$0xf]
    %v142 = vld [vmem:[#allocation2 + $0xe8] sm:$0xf]
    %v143 = vld [vmem:[#allocation2 + $0xec] sm:$0xf]
    %v144 = vld [vmem:[#allocation2 + $0xf0] sm:$0xf]
    %v145 = vld [vmem:[#allocation2 + $0xf4] sm:$0xf]
    %v146 = vld [vmem:[#allocation2 + $0xf8] sm:$0xf]
    %v147 = vld [vmem:[#allocation2 + $0xfc] sm:$0xf]
    %v148 = vld [vmem:[#allocation2 + $0x100] sm:$0xf]
    %v149 = vld [vmem:[#allocation2 + $0x104] sm:$0xf]
    %v150 = vld [vmem:[#allocation2 + $0x108] sm:$0xf]
    %v151 = vld [vmem:[#allocation2 + $0x10c] sm:$0xf]
    %v152 = vld [vmem:[#allocation2 + $0x110] sm:$0xf]
    %v153 = vld [vmem:[#allocation2 + $0x114] sm:$0xf]
    %v154 = vld [vmem:[#allocation2 + $0x118] sm:$0xf]
    %v155 = vld [vmem:[#allocation2 + $0x11c] sm:$0xf]
    %v156 = vld [vmem:[#allocation2 + $0x120] sm:$0xf]
    %v157 = vld [vmem:[#allocation2 + $0x124] sm:$0xf]
    %v158 = vld [vmem:[#allocation2 + $0x128] sm:$0xf]
    %v159 = vld [vmem:[#allocation2 + $0x12c] sm:$0xf]
    %v160 = vld [vmem:[#allocation2 + $0x130] sm:$0xf]
    %v161 = vld [vmem:[#allocation2 + $0x134] sm:$0xf]
    %v162 = vld [vmem:[#allocation2 + $0x138] sm:$0xf]
    %v163 = vld [vmem:[#allocation2 + $0x13c] sm:$0xf]
    %v164 = vld [vmem:[#allocation2 + $0x140] sm:$0xf]
    %v165 = vld [vmem:[#allocation2 + $0x144] sm:$0xf]
    %v166 = vld [vmem:[#allocation2 + $0x148] sm:$0xf]
    %v167 = vld [vmem:[#allocation2 + $0x14c] sm:$0xf]
    %v168 = vld [vmem:[#allocation2 + $0x150] sm:$0xf]
    %v169 = vld [vmem:[#allocation2 + $0x154] sm:$0xf]
    %v170 = vld [vmem:[#allocation2 + $0x158] sm:$0xf]
    %v171 = vld [vmem:[#allocation2 + $0x15c] sm:$0xf]
    %v172 = vld [vmem:[#allocation2 + $0x160] sm:$0xf]
    %v173 = vld [vmem:[#allocation2 + $0x164] sm:$0xf]
    %v174 = vld [vmem:[#allocation2 + $0x168] sm:$0xf]
    %v175 = vld [vmem:[#allocation2 + $0x16c] sm:$0xf]
    %v176 = vld [vmem:[#allocation2 + $0x170] sm:$0xf]
    %v177 = vld [vmem:[#allocation2 + $0x174] sm:$0xf]
    %v178 = vld [vmem:[#allocation2 + $0x178] sm:$0xf]
    %v179 = vld [vmem:[#allocation2 + $0x17c] sm:$0xf]
    %v180 = vld [vmem:[#allocation2 + $0x180] sm:$0xf]
    %v181 = vld [vmem:[#allocation2 + $0x184] sm:$0xf]
    %v182 = vld [vmem:[#allocation2 + $0x188] sm:$0xf]
    %v183 = vld [vmem:[#allocation2 + $0x18c] sm:$0xf]
    %v184 = vld [vmem:[#allocation2 + $0x190] sm:$0xf]
    %v185 = vld [vmem:[#allocation2 + $0x194] sm:$0xf]
    %v186 = vld [vmem:[#allocation2 + $0x198] sm:$0xf]
    %v187 = vld [vmem:[#allocation2 + $0x19c] sm:$0xf]
    %v188 = vld [vmem:[#allocation2 + $0x1a0] sm:$0xf]
    %v189 = vld [vmem:[#allocation2 + $0x1a4] sm:$0xf]
    %v190 = vld [vmem:[#allocation2 + $0x1a8] sm:$0xf]
    %v191 = vld [vmem:[#allocation2 + $0x1ac] sm:$0xf]
    %v192 = vld [vmem:[#allocation2 + $0x1b0] sm:$0xf]
    %v193 = vld [vmem:[#allocation2 + $0x1b4] sm:$0xf]
    %v194 = vld [vmem:[#allocation2 + $0x1b8] sm:$0xf]
    %v195 = vld [vmem:[#allocation2 + $0x1bc] sm:$0xf]
    %v196 = vld [vmem:[#allocation2 + $0x1c0] sm:$0xf]
    %v197 = vld [vmem:[#allocation2 + $0x1c4] sm:$0xf]
    %v198 = vld [vmem:[#allocation2 + $0x1c8] sm:$0xf]
    %v199 = vld [vmem:[#allocation2 + $0x1cc] sm:$0xf]
    %v200 = vld [vmem:[#allocation2 + $0x1d0] sm:$0xf]
    %v201 = vld [vmem:[#allocation2 + $0x1d4] sm:$0xf]
    %v202 = vld [vmem:[#allocation2 + $0x1d8] sm:$0xf]
    %v203 = vld [vmem:[#allocation2 + $0x1dc] sm:$0xf]
    %v204 = vld [vmem:[#allocation2 + $0x1e0] sm:$0xf]
    %v205 = vld [vmem:[#allocation2 + $0x1e4] sm:$0xf]
    %v206 = vld [vmem:[#allocation2 + $0x1e8] sm:$0xf]
    %v207 = vld [vmem:[#allocation2 + $0x1ec] sm:$0xf]
    %v208 = vld [vmem:[#allocation2 + $0x1f0] sm:$0xf]
    %v209 = vld [vmem:[#allocation2 + $0x1f4] sm:$0xf]
    %v210 = vld [vmem:[#allocation2 + $0x1f8] sm:$0xf]
    %v211 = vld [vmem:[#allocation2 + $0x1fc] sm:$0xf]
    %v212 = vld [vmem:[%s2] sm:$0x1]
    %v214 = vlaneseq
    %v215 = vshrl.u32 %v214, 7
    %v216 = vsub.s32 0, %v215
    %v217 = vrot.slane %v212, %v216
    %v347 = vunpack.c.l.b16 %v84
    %v348 = vunpack.c.l.b16 %v85
    %v349 = vunpack.c.l.b16 %v86
    %v350 = vunpack.c.l.b16 %v87
    %v351 = vunpack.c.l.b16 %v88
    %v352 = vunpack.c.l.b16 %v89
    %v353 = vunpack.c.l.b16 %v90
    %v354 = vunpack.c.l.b16 %v91
    %v355 = vunpack.c.l.b16 %v92
    %v356 = vunpack.c.l.b16 %v93
    %v357 = vunpack.c.l.b16 %v94
    %v358 = vunpack.c.l.b16 %v95
    %v359 = vunpack.c.l.b16 %v96
    %v360 = vunpack.c.l.b16 %v97
    %v361 = vunpack.c.l.b16 %v98
    %v362 = vunpack.c.l.b16 %v99
    %v363 = vunpack.c.l.b16 %v100
    %v364 = vunpack.c.l.b16 %v101
    %v365 = vunpack.c.l.b16 %v102
    %v366 = vunpack.c.l.b16 %v103
    %v367 = vunpack.c.l.b16 %v104
    %v368 = vunpack.c.l.b16 %v105
    %v369 = vunpack.c.l.b16 %v106
    %v370 = vunpack.c.l.b16 %v107
    %v371 = vunpack.c.l.b16 %v108
    %v372 = vunpack.c.l.b16 %v109
    %v373 = vunpack.c.l.b16 %v110
    %v374 = vunpack.c.l.b16 %v111
    %v375 = vunpack.c.l.b16 %v112
    %v376 = vunpack.c.l.b16 %v113
    %v377 = vunpack.c.l.b16 %v114
    %v378 = vunpack.c.l.b16 %v115
    %v379 = vunpack.c.l.b16 %v116
    %v380 = vunpack.c.l.b16 %v117
    %v381 = vunpack.c.l.b16 %v118
    %v382 = vunpack.c.l.b16 %v119
    %v383 = vunpack.c.l.b16 %v120
    %v384 = vunpack.c.l.b16 %v121
    %v385 = vunpack.c.l.b16 %v122
    %v386 = vunpack.c.l.b16 %v123
    %v387 = vunpack.c.l.b16 %v124
    %v388 = vunpack.c.l.b16 %v125
    %v389 = vunpack.c.l.b16 %v126
    %v390 = vunpack.c.l.b16 %v127
    %v391 = vunpack.c.l.b16 %v128
    %v392 = vunpack.c.l.b16 %v129
    %v393 = vunpack.c.l.b16 %v130
    %v394 = vunpack.c.l.b16 %v131
    %v395 = vunpack.c.l.b16 %v132
    %v396 = vunpack.c.l.b16 %v133
    %v397 = vunpack.c.l.b16 %v134
    %v398 = vunpack.c.l.b16 %v135
    %v399 = vunpack.c.l.b16 %v136
    %v400 = vunpack.c.l.b16 %v137
    %v401 = vunpack.c.l.b16 %v138
    %v402 = vunpack.c.l.b16 %v139
    %v403 = vunpack.c.l.b16 %v140
    %v404 = vunpack.c.l.b16 %v141
    %v405 = vunpack.c.l.b16 %v142
    %v406 = vunpack.c.l.b16 %v143
    %v407 = vunpack.c.l.b16 %v144
    %v408 = vunpack.c.l.b16 %v145
    %v409 = vunpack.c.l.b16 %v146
    %v410 = vunpack.c.l.b16 %v147
    %v411 = vunpack.c.l.b16 %v148
    %v412 = vunpack.c.l.b16 %v149
    %v413 = vunpack.c.l.b16 %v150
    %v414 = vunpack.c.l.b16 %v151
    %v415 = vunpack.c.l.b16 %v152
    %v416 = vunpack.c.l.b16 %v153
    %v417 = vunpack.c.l.b16 %v154
    %v418 = vunpack.c.l.b16 %v155
    %v419 = vunpack.c.l.b16 %v156
    %v420 = vunpack.c.l.b16 %v157
    %v421 = vunpack.c.l.b16 %v158
    %v422 = vunpack.c.l.b16 %v159
    %v423 = vunpack.c.l.b16 %v160
    %v424 = vunpack.c.l.b16 %v161
    %v425 = vunpack.c.l.b16 %v162
    %v426 = vunpack.c.l.b16 %v163
    %v427 = vunpack.c.l.b16 %v164
    %v428 = vunpack.c.l.b16 %v165
    %v429 = vunpack.c.l.b16 %v166
    %v430 = vunpack.c.l.b16 %v167
    %v431 = vunpack.c.l.b16 %v168
    %v432 = vunpack.c.l.b16 %v169
    %v433 = vunpack.c.l.b16 %v170
    %v434 = vunpack.c.l.b16 %v171
    %v435 = vunpack.c.l.b16 %v172
    %v436 = vunpack.c.l.b16 %v173
    %v437 = vunpack.c.l.b16 %v174
    %v438 = vunpack.c.l.b16 %v175
    %v439 = vunpack.c.l.b16 %v176
    %v440 = vunpack.c.l.b16 %v177
    %v441 = vunpack.c.l.b16 %v178
    %v442 = vunpack.c.l.b16 %v179
    %v443 = vunpack.c.l.b16 %v180
    %v444 = vunpack.c.l.b16 %v181
    %v445 = vunpack.c.l.b16 %v182
    %v446 = vunpack.c.l.b16 %v183
    %v447 = vunpack.c.l.b16 %v184
    %v448 = vunpack.c.l.b16 %v185
    %v449 = vunpack.c.l.b16 %v186
    %v450 = vunpack.c.l.b16 %v187
    %v451 = vunpack.c.l.b16 %v188
    %v452 = vunpack.c.l.b16 %v189
    %v453 = vunpack.c.l.b16 %v190
    %v454 = vunpack.c.l.b16 %v191
    %v455 = vunpack.c.l.b16 %v192
    %v456 = vunpack.c.l.b16 %v193
    %v457 = vunpack.c.l.b16 %v194
    %v458 = vunpack.c.l.b16 %v195
    %v459 = vunpack.c.l.b16 %v196
    %v460 = vunpack.c.l.b16 %v197
    %v461 = vunpack.c.l.b16 %v198
    %v462 = vunpack.c.l.b16 %v199
    %v463 = vunpack.c.l.b16 %v200
    %v464 = vunpack.c.l.b16 %v201
    %v465 = vunpack.c.l.b16 %v202
    %v466 = vunpack.c.l.b16 %v203
    %v467 = vunpack.c.l.b16 %v204
    %v468 = vunpack.c.l.b16 %v205
    %v469 = vunpack.c.l.b16 %v206
    %v470 = vunpack.c.l.b16 %v207
    %v471 = vunpack.c.l.b16 %v208
    %v472 = vunpack.c.l.b16 %v209
    %v473 = vunpack.c.l.b16 %v210
    %v474 = vunpack.c.l.b16 %v211
    %v475 = vpack.c.b16 %v348, %v347
    %v476 = vpack.c.b16 %v350, %v349
    %v477 = vpack.c.b16 %v352, %v351
    %v478 = vpack.c.b16 %v354, %v353
    %v479 = vpack.c.b16 %v356, %v355
    %v480 = vpack.c.b16 %v358, %v357
    %v481 = vpack.c.b16 %v360, %v359
    %v482 = vpack.c.b16 %v362, %v361
    %v483 = vpack.c.b16 %v364, %v363
    %v484 = vpack.c.b16 %v366, %v365
    %v485 = vpack.c.b16 %v368, %v367
    %v486 = vpack.c.b16 %v370, %v369
    %v487 = vpack.c.b16 %v372, %v371
    %v488 = vpack.c.b16 %v374, %v373
    %v489 = vpack.c.b16 %v376, %v375
    %v490 = vpack.c.b16 %v378, %v377
    %v491 = vpack.c.b16 %v380, %v379
    %v492 = vpack.c.b16 %v382, %v381
    %v493 = vpack.c.b16 %v384, %v383
    %v494 = vpack.c.b16 %v386, %v385
    %v495 = vpack.c.b16 %v388, %v387
    %v496 = vpack.c.b16 %v390, %v389
    %v497 = vpack.c.b16 %v392, %v391
    %v498 = vpack.c.b16 %v394, %v393
    %v499 = vpack.c.b16 %v396, %v395
    %v500 = vpack.c.b16 %v398, %v397
    %v501 = vpack.c.b16 %v400, %v399
    %v502 = vpack.c.b16 %v402, %v401
    %v503 = vpack.c.b16 %v404, %v403
    %v504 = vpack.c.b16 %v406, %v405
    %v505 = vpack.c.b16 %v408, %v407
    %v506 = vpack.c.b16 %v410, %v409
    %v507 = vpack.c.b16 %v412, %v411
    %v508 = vpack.c.b16 %v414, %v413
    %v509 = vpack.c.b16 %v416, %v415
    %v510 = vpack.c.b16 %v418, %v417
    %v511 = vpack.c.b16 %v420, %v419
    %v512 = vpack.c.b16 %v422, %v421
    %v513 = vpack.c.b16 %v424, %v423
    %v514 = vpack.c.b16 %v426, %v425
    %v515 = vpack.c.b16 %v428, %v427
    %v516 = vpack.c.b16 %v430, %v429
    %v517 = vpack.c.b16 %v432, %v431
    %v518 = vpack.c.b16 %v434, %v433
    %v519 = vpack.c.b16 %v436, %v435
    %v520 = vpack.c.b16 %v438, %v437
    %v521 = vpack.c.b16 %v440, %v439
    %v522 = vpack.c.b16 %v442, %v441
    %v523 = vpack.c.b16 %v444, %v443
    %v524 = vpack.c.b16 %v446, %v445
    %v525 = vpack.c.b16 %v448, %v447
    %v526 = vpack.c.b16 %v450, %v449
    %v527 = vpack.c.b16 %v452, %v451
    %v528 = vpack.c.b16 %v454, %v453
    %v529 = vpack.c.b16 %v456, %v455
    %v530 = vpack.c.b16 %v458, %v457
    %v531 = vpack.c.b16 %v460, %v459
    %v532 = vpack.c.b16 %v462, %v461
    %v533 = vpack.c.b16 %v464, %v463
    %v534 = vpack.c.b16 %v466, %v465
    %v535 = vpack.c.b16 %v468, %v467
    %v536 = vpack.c.b16 %v470, %v469
    %v537 = vpack.c.b16 %v472, %v471
    %v538 = vpack.c.b16 %v474, %v473
    %603 = vmatprep.subr.bf16.mxu0 0
    %604 = vmatpush1.bf16.msra.mxu0 %v482
    %605 = vmatprep.subr.bf16.mxu0 0
    %606 = vmatpush1.bf16.msra.mxu0 %v481
    %607 = vmatprep.subr.bf16.mxu0 0
    %608 = vmatpush1.bf16.msra.mxu0 %v480
    %609 = vmatprep.subr.bf16.mxu0 0
    %610 = vmatpush1.bf16.msra.mxu0 %v479
    %611 = vmatprep.subr.bf16.mxu0 0
    %612 = vmatpush1.bf16.msra.mxu0 %v478
    %613 = vmatprep.subr.bf16.mxu0 0
    %614 = vmatpush1.bf16.msra.mxu0 %v477
    %615 = vmatprep.subr.bf16.mxu0 0
    %616 = vmatpush1.bf16.msra.mxu0 %v476
    %617 = vmatprep.subr.bf16.mxu0 0
    %618 = vmatpush1.bf16.msra.mxu0 %v475
    %619 = vmatprep.subr.bf16.mxu0 0
    %620 = vmatpush2.bf16.msra.mxu0 %v490
    %621 = vmatprep.subr.bf16.mxu0 0
    %622 = vmatpush2.bf16.msra.mxu0 %v489
    %623 = vmatprep.subr.bf16.mxu0 0
    %624 = vmatpush2.bf16.msra.mxu0 %v488
    %625 = vmatprep.subr.bf16.mxu0 0
    %626 = vmatpush2.bf16.msra.mxu0 %v487
    %627 = vmatprep.subr.bf16.mxu0 0
    %628 = vmatpush2.bf16.msra.mxu0 %v486
    %629 = vmatprep.subr.bf16.mxu0 0
    %630 = vmatpush2.bf16.msra.mxu0 %v485
    %631 = vmatprep.subr.bf16.mxu0 0
    %632 = vmatpush2.bf16.msra.mxu0 %v484
    %633 = vmatprep.subr.bf16.mxu0 0
    %634 = vmatpush2.bf16.msra.mxu0 %v483
    %635 = vmatprep.mubr.bf16.mxu0 %v77
    %636 = vmatmul.mubr.bf16.gmra.mxu0 %v76
    %v637 = vpop.f32.mrf.mxu0
    %v638 = vadd.f32 %v217, %v637
    %v639 = vpop.f32.mrf.mxu0
    %v640 = vpop.f32.mrf.mxu0
    %v641 = vpop.f32.mrf.mxu0
    %642 = vdwg.mxu0
    %643 = vmatprep.subr.bf16.mxu0 0
    %644 = vmatpush1.bf16.msra.mxu0 %v498
    %645 = vmatprep.subr.bf16.mxu0 0
    %646 = vmatpush1.bf16.msra.mxu0 %v497
    %647 = vmatprep.subr.bf16.mxu0 0
    %648 = vmatpush1.bf16.msra.mxu0 %v496
    %649 = vmatprep.subr.bf16.mxu0 0
    %650 = vmatpush1.bf16.msra.mxu0 %v495
    %651 = vmatprep.subr.bf16.mxu0 0
    %652 = vmatpush1.bf16.msra.mxu0 %v494
    %653 = vmatprep.subr.bf16.mxu0 0
    %654 = vmatpush1.bf16.msra.mxu0 %v493
    %655 = vmatprep.subr.bf16.mxu0 0
    %656 = vmatpush1.bf16.msra.mxu0 %v492
    %657 = vmatprep.subr.bf16.mxu0 0
    %658 = vmatpush1.bf16.msra.mxu0 %v491
    %659 = vmatprep.subr.bf16.mxu0 0
    %660 = vmatpush2.bf16.msra.mxu0 %v506
    %661 = vmatprep.subr.bf16.mxu0 0
    %662 = vmatpush2.bf16.msra.mxu0 %v505
    %663 = vmatprep.subr.bf16.mxu0 0
    %664 = vmatpush2.bf16.msra.mxu0 %v504
    %665 = vmatprep.subr.bf16.mxu0 0
    %666 = vmatpush2.bf16.msra.mxu0 %v503
    %667 = vmatprep.subr.bf16.mxu0 0
    %668 = vmatpush2.bf16.msra.mxu0 %v502
    %669 = vmatprep.subr.bf16.mxu0 0
    %670 = vmatpush2.bf16.msra.mxu0 %v501
    %671 = vmatprep.subr.bf16.mxu0 0
    %672 = vmatpush2.bf16.msra.mxu0 %v500
    %673 = vmatprep.subr.bf16.mxu0 0
    %674 = vmatpush2.bf16.msra.mxu0 %v499
    %675 = vmatprep.mubr.bf16.mxu0 %v79
    %676 = vmatmul.mubr.bf16.gmra.mxu0 %v78
    %v677 = vpop.f32.mrf.mxu0
    %v678 = vadd.f32 %v638, %v677
    %v679 = vpop.f32.mrf.mxu0
    %v680 = vpop.f32.mrf.mxu0
    %v681 = vpop.f32.mrf.mxu0
    %682 = vdwg.mxu0
    %683 = vmatprep.subr.bf16.mxu0 0
    %684 = vmatpush1.bf16.msra.mxu0 %v514
    %685 = vmatprep.subr.bf16.mxu0 0
    %686 = vmatpush1.bf16.msra.mxu0 %v513
    %687 = vmatprep.subr.bf16.mxu0 0
    %688 = vmatpush1.bf16.msra.mxu0 %v512
    %689 = vmatprep.subr.bf16.mxu0 0
    %690 = vmatpush1.bf16.msra.mxu0 %v511
    %691 = vmatprep.subr.bf16.mxu0 0
    %692 = vmatpush1.bf16.msra.mxu0 %v510
    %693 = vmatprep.subr.bf16.mxu0 0
    %694 = vmatpush1.bf16.msra.mxu0 %v509
    %695 = vmatprep.subr.bf16.mxu0 0
    %696 = vmatpush1.bf16.msra.mxu0 %v508
    %697 = vmatprep.subr.bf16.mxu0 0
    %698 = vmatpush1.bf16.msra.mxu0 %v507
    %699 = vmatprep.subr.bf16.mxu0 0
    %700 = vmatpush2.bf16.msra.mxu0 %v522
    %701 = vmatprep.subr.bf16.mxu0 0
    %702 = vmatpush2.bf16.msra.mxu0 %v521
    %703 = vmatprep.subr.bf16.mxu0 0
    %704 = vmatpush2.bf16.msra.mxu0 %v520
    %705 = vmatprep.subr.bf16.mxu0 0
    %706 = vmatpush2.bf16.msra.mxu0 %v519
    %707 = vmatprep.subr.bf16.mxu0 0
    %708 = vmatpush2.bf16.msra.mxu0 %v518
    %709 = vmatprep.subr.bf16.mxu0 0
    %710 = vmatpush2.bf16.msra.mxu0 %v517
    %711 = vmatprep.subr.bf16.mxu0 0
    %712 = vmatpush2.bf16.msra.mxu0 %v516
    %713 = vmatprep.subr.bf16.mxu0 0
    %714 = vmatpush2.bf16.msra.mxu0 %v515
    %715 = vmatprep.mubr.bf16.mxu0 %v81
    %716 = vmatmul.mubr.bf16.gmra.mxu0 %v80
    %v717 = vpop.f32.mrf.mxu0
    %v718 = vadd.f32 %v678, %v717
    %v719 = vpop.f32.mrf.mxu0
    %v720 = vpop.f32.mrf.mxu0
    %v721 = vpop.f32.mrf.mxu0
    %722 = vdwg.mxu0
    %723 = vmatprep.subr.bf16.mxu0 0
    %724 = vmatpush1.bf16.msra.mxu0 %v530
    %725 = vmatprep.subr.bf16.mxu0 0
    %726 = vmatpush1.bf16.msra.mxu0 %v529
    %727 = vmatprep.subr.bf16.mxu0 0
    %728 = vmatpush1.bf16.msra.mxu0 %v528
    %729 = vmatprep.subr.bf16.mxu0 0
    %730 = vmatpush1.bf16.msra.mxu0 %v527
    %731 = vmatprep.subr.bf16.mxu0 0
    %732 = vmatpush1.bf16.msra.mxu0 %v526
    %733 = vmatprep.subr.bf16.mxu0 0
    %734 = vmatpush1.bf16.msra.mxu0 %v525
    %735 = vmatprep.subr.bf16.mxu0 0
    %736 = vmatpush1.bf16.msra.mxu0 %v524
    %737 = vmatprep.subr.bf16.mxu0 0
    %738 = vmatpush1.bf16.msra.mxu0 %v523
    %739 = vmatprep.subr.bf16.mxu0 0
    %740 = vmatpush2.bf16.msra.mxu0 %v538
    %741 = vmatprep.subr.bf16.mxu0 0
    %742 = vmatpush2.bf16.msra.mxu0 %v537
    %743 = vmatprep.subr.bf16.mxu0 0
    %744 = vmatpush2.bf16.msra.mxu0 %v536
    %745 = vmatprep.subr.bf16.mxu0 0
    %746 = vmatpush2.bf16.msra.mxu0 %v535
    %747 = vmatprep.subr.bf16.mxu0 0
    %748 = vmatpush2.bf16.msra.mxu0 %v534
    %749 = vmatprep.subr.bf16.mxu0 0
    %750 = vmatpush2.bf16.msra.mxu0 %v533
    %751 = vmatprep.subr.bf16.mxu0 0
    %752 = vmatpush2.bf16.msra.mxu0 %v532
    %753 = vmatprep.subr.bf16.mxu0 0
    %754 = vmatpush2.bf16.msra.mxu0 %v531
    %755 = vmatprep.mubr.bf16.mxu0 %v83
    %756 = vmatmul.mubr.bf16.gmra.mxu0 %v82
    %v757 = vpop.f32.mrf.mxu0
    %v758 = vadd.f32 %v718, %v757
    %v759 = vpop.f32.mrf.mxu0
    %v760 = vpop.f32.mrf.mxu0
    %v761 = vpop.f32.mrf.mxu0
    %762 = vdwg.mxu0
    %v763 = vmul.f32 %v758, 0.4
    %v764 = vtanh.pop %v763
    %v765 = vmul.f32 %v764, 2.5
    %766 = vst [vmem:[#allocation5] sm:$0x3] %v765
    // Predicated region
    $region18: #{weak_learner_forward.1} parent=1 // pred_check
      _
    $region19: #{weak_learner_forward.1} parent=1 // pred_check_branch
      %768 = sbr.rel (0) target = $region21
    $region20: #{weak_learner_forward.1} parent=1 // pred_region
      %s770 = ssub.s32 32, 32
      %771 = vsyncadd [#allocation4], %s770
      %s773 = sshll.u32 [#allocation5], 4
      %s774 = int_to_ptr.vmem [resolvable:$true] %s773
      %776 = dma.vmem_to_hbm [thread:$0]  %s774, 32, %s3, [#allocation4]
    $region21: #{weak_learner_forward.1} parent=1 // pred_fallthru
      _
    // Predicated region
    $region22: #{weak_learner_forward.1} parent=1 // pred_check
      _
    $region23: #{weak_learner_forward.1} parent=1 // pred_check_branch
      %778 = sbr.rel (0) target = $region25
    $region24: #{weak_learner_forward.1} parent=1 // pred_region
      %779 = dma.done [#allocation4], 32
    $region25: #{weak_learner_forward.1} parent=1 // pred_fallthru
      _
    %780 = vsyncpa [#allocation3], 1
    %781 = vsyncpa [#allocation4], 1

</llo_original>
